<compile_context>
chip_gen: v5e
topology: v5e:2x2
jax: 0.10.0
libtpu: 0.0.40
codegen_flags: <defaults>
</compile_context>

<pallas_src>
import jax
import jax.numpy as jnp
from jax import lax
from jax.experimental import pallas as pl
from jax.experimental.pallas import tpu as pltpu


def color_constency_loss(enhances: jax.Array, *, tile_n: int | None = None) -> jax.Array:
    """enhances: (B, 3, H, W) float array (NCHW). Returns scalar float32."""
    B, C, H, W = enhances.shape
    assert C == 3, "color constancy loss expects 3 channels (RGB)"
    HW = H * W
    RC = B * C
    itemsize = jnp.dtype(enhances.dtype).itemsize

    # ---- pick the lane tile size (multiple of 128, VMEM-budgeted) ----------
    if tile_n is None:
        # keep double-buffered input tiles around <= ~16 MiB (safe on v7x's 64 MiB VMEM)
        budget_bytes = 16 * 1024 * 1024
        tn_cap = (budget_bytes // (2 * RC * itemsize)) // 128 * 128
        tn_cap = max(128, min(tn_cap, 8192))
        TN = HW if HW <= tn_cap else tn_cap
    else:
        assert tile_n == HW or tile_n % 128 == 0, "tile_n must be H*W or a multiple of 128"
        TN = tile_n

    num_tiles = (HW + TN - 1) // TN
    needs_mask = (HW % TN) != 0  # static Python bool — mask only when required

    # ---- kernel: accumulate raw per-plane (row) sums over spatial tiles ----
    def kernel(x_ref, out_ref):
        j = pl.program_id(0)

        @pl.when(j == 0)
        def _init():
            out_ref[...] = jnp.zeros_like(out_ref)

        x = x_ref[...].astype(jnp.float32)  # (RC, TN), f32 accumulation
        if needs_mask:
            col = j * TN + lax.broadcasted_iota(jnp.int32, (RC, TN), 1)
            x = jnp.where(col < HW, x, 0.0)
        out_ref[...] += jnp.sum(x, axis=-1, keepdims=True)

    x2 = enhances.reshape(RC, HW)  # free, contiguous reshape in plain JAX

    sums = pl.pallas_call(
        kernel,
        out_shape=jax.ShapeDtypeStruct((RC, 1), jnp.float32),
        grid_spec=pltpu.PrefetchScalarGridSpec(
            num_scalar_prefetch=0,
            grid=(num_tiles,),
            in_specs=[pl.BlockSpec((RC, TN), lambda j: (0, j))],
            out_specs=pl.BlockSpec((RC, 1), lambda j: (0, 0)),
        ),
        compiler_params=pltpu.CompilerParams(
            dimension_semantics=("arbitrary",),
            vmem_limit_bytes=32 * 1024 * 1024,
        ),
        cost_estimate=pl.CostEstimate(
            flops=2 * RC * HW,
            transcendentals=0,
            bytes_accessed=RC * HW * itemsize + RC * 4,
        ),
    )(x2)

    # ---- tiny O(B) finalize in the wrapper (single divide by H*W, channel diffs) ----
    plane_avg = sums[:, 0].reshape(B, C) * (1.0 / HW)  # (B, 3)
    r, g, b = plane_avg[:, 0], plane_avg[:, 1], plane_avg[:, 2]
    return jnp.mean((r - g) ** 2 + (g - b) ** 2 + (b - r) ** 2)


def _reference(enhances: jax.Array) -> jax.Array:
    plane_avg = jnp.mean(enhances.astype(jnp.float32), axis=(2, 3))
    r, g, b = plane_avg[:, 0], plane_avg[:, 1], plane_avg[:, 2]
    return jnp.mean((r - g) ** 2 + (g - b) ** 2 + (b - r) ** 2)


if __name__ == "__main__":
    key = jax.random.PRNGKey(0)

    # small, module-consistent shape: batch=2, channels=3 (RGB), spatial=16x16
    x = jax.random.uniform(key, (2, 3, 16, 16), dtype=jnp.float32)
    loss = jax.jit(color_constency_loss)(x)
    jax.block_until_ready(loss)
    ref = _reference(x)
    assert jnp.allclose(loss, ref, rtol=1e-5, atol=1e-6), (loss, ref)

    # also exercise the tiled + masked accumulation path (H*W not divisible by tile)
    x2 = jax.random.uniform(jax.random.PRNGKey(0), (2, 3, 16, 18), dtype=jnp.float32)
    loss2 = jax.jit(lambda a: color_constency_loss(a, tile_n=128))(x2)
    jax.block_until_ready(loss2)
    ref2 = _reference(x2)
    assert jnp.allclose(loss2, ref2, rtol=1e-5, atol=1e-6), (loss2, ref2)

    print("KERNEL_OK")
</pallas_src>

<mosaic_0001>
module attributes {stable_mosaic.version = 11 : i64} {
  func.func @kernel(%arg0: i32, %arg1: memref<6x256xf32, #tpu.memory_space<vmem>>, %arg2: memref<6x1xf32, #tpu.memory_space<vmem>>) attributes {dimension_semantics = [#tpu.dimension_semantics<arbitrary>], iteration_bounds = array<i64: 1>, scalar_prefetch = 0 : i64, scratch_operands = 0 : i64, tpu.core_type = #tpu.core_type<tc>, window_params = [{transform_indices = @transform_0, window_bounds = array<i64: 6, 256>}, {pipeline_mode = #tpu.pipeline_mode<synchronous>, transform_indices = @transform_1, window_bounds = array<i64: 6, 1>}]} {
    %c0_i32 = arith.constant 0 : i32
    %0 = arith.cmpi eq, %arg0, %c0_i32 : i32
    %1 = arith.extui %0 : i1 to i32
    %c0_i32_0 = arith.constant 0 : i32
    %2 = arith.cmpi ne, %1, %c0_i32_0 : i32
    scf.if %2 {
      %cst_6 = arith.constant 0.000000e+00 : f32
      %9 = vector.broadcast %cst_6 : f32 to vector<6x1xf32>
      %c0_7 = arith.constant 0 : index
      %c0_8 = arith.constant 0 : index
      %10 = vector.load %arg2[%c0_7, %c0_8] : memref<6x1xf32, #tpu.memory_space<vmem>>, vector<6x1xf32>
      tpu.vector_store %arg2[%c0_7, %c0_8], %9 {strides = array<i32>} : memref<6x1xf32, #tpu.memory_space<vmem>>, vector<6x1xf32>,
    } else {
    }
    %c0 = arith.constant 0 : index
    %c0_1 = arith.constant 0 : index
    %3 = vector.load %arg1[%c0, %c0_1] : memref<6x256xf32, #tpu.memory_space<vmem>>, vector<6x256xf32>
    %c0_2 = arith.constant 0 : index
    %c0_3 = arith.constant 0 : index
    %4 = vector.load %arg2[%c0_2, %c0_3] : memref<6x1xf32, #tpu.memory_space<vmem>>, vector<6x1xf32>
    %cst = arith.constant dense<0.000000e+00> : vector<6xf32>
    %5 = vector.multi_reduction <add>, %3, %cst [1] : vector<6x256xf32> to vector<6xf32>
    %6 = vector.shape_cast %5 : vector<6xf32> to vector<6x1xf32>
    %7 = arith.addf %4, %6 : vector<6x1xf32>
    %c0_4 = arith.constant 0 : index
    %c0_5 = arith.constant 0 : index
    %8 = vector.load %arg2[%c0_4, %c0_5] : memref<6x1xf32, #tpu.memory_space<vmem>>, vector<6x1xf32>
    tpu.vector_store %arg2[%c0_4, %c0_5], %7 {strides = array<i32>} : memref<6x1xf32, #tpu.memory_space<vmem>>, vector<6x1xf32>,
    return
  }
  func.func @transform_0(%arg0: i32) -> (i32, i32) {
    %c0_i32 = arith.constant 0 : i32
    %c0_i32_0 = arith.constant 0 : i32
    return %c0_i32, %arg0 : i32, i32
  }
  func.func @transform_1(%arg0: i32) -> (i32, i32) {
    %c0_i32 = arith.constant 0 : i32
    %c0_i32_0 = arith.constant 0 : i32
    %c0_i32_1 = arith.constant 0 : i32
    return %c0_i32, %c0_i32_0 : i32, i32
  }
}

</mosaic_0001>

<llo_original>
// kernel: color_constency_loss.1
$region0: #{color_constency_loss.1}
  #allocation0 [shape = 'u32[]', space=smem, size = 0x4, offset = 0x4, fixed_abs, tag = 'smem constant byte address 0x4 - core index']
  #allocation1 [shape = 'u32[72,128]{1,0:T(1,128)}', space=vmem, size = 0x9000, scoped, tag = 'internal scratch']
  %s0 = inlined_call_operand.vmem [shape: f32[6,256], index: 0, kind: input, shape index: {}]
  %s1 = inlined_call_operand.vmem [shape: f32[6,1], index: 1, kind: output, shape index: {}]
  %s2 = sld [smem:[#allocation0]]
  $region18: #{color_constency_loss.1} parent=0
    _
  %s4 = ssub.s32 1, %s2
  %s5 = scalar_select 0, %s4, %s2
  // Predicated region
  $region2: #{color_constency_loss.1} parent=0 // pred_check
    _
  $region3: #{color_constency_loss.1} parent=0 // pred_check_branch
    %7 = sbr.rel (0) target = $region5
  $region4: #{color_constency_loss.1} parent=0 // pred_region
    _
  $region5: #{color_constency_loss.1} parent=0 // pred_fallthru
    _
  %p8 = scmp.eq.s32.totalorder 0, 0
  // Predicated region
  $region6: #{color_constency_loss.1} parent=0 // pred_check
    %p9 = pneg %p8
  $region7: #{color_constency_loss.1} parent=0 // pred_check_branch
    %11 = sbr.rel (%p9) target = $region9
  $region8: #{color_constency_loss.1} parent=0 // pred_region
    %vm12 = vcmask 5120
    %13 = vst.msk [vmem:[%s1] sm:$0x3f] %vm12, 0.0
  $region9: #{color_constency_loss.1} parent=0 // pred_fallthru
    _
  %v14 = vld [vmem:[%s0] sm:$0x3f]
  %v15 = vld [vmem:[%s0 + $0x8] sm:$0x3f]
  %v16 = vld [vmem:[%s1] sm:$0x3f]
  %vm17 = vcmask 1045504
  %v18 = vsel %vm17, %v14, 0.0
  %v19 = vsel %vm17, %v15, 0.0
  %v20 = vadd.f32 %v18, %v19
  %21 = vadd.xlane.f32.xlu0 %v20
  %v22 = vpop.xlane.xlu0 %21
  %v23 = vadd.f32 %v16, %v22
  %vm24 = vcmask 5120
  %25 = vst.msk [vmem:[%s1] sm:$0x3f] %vm24, %v23
  // Predicated region
  $region10: #{color_constency_loss.1} parent=0 // pred_check
    _
  $region11: #{color_constency_loss.1} parent=0 // pred_check_branch
    %27 = sbr.rel (0) target = $region13
  $region12: #{color_constency_loss.1} parent=0 // pred_region
    _
  $region13: #{color_constency_loss.1} parent=0 // pred_fallthru
    _
  // Predicated region
  $region14: #{color_constency_loss.1} parent=0 // pred_check
    _
  $region15: #{color_constency_loss.1} parent=0 // pred_check_branch
    %29 = sbr.rel (0) target = $region17
  $region16: #{color_constency_loss.1} parent=0 // pred_region
    _
  $region17: #{color_constency_loss.1} parent=0 // pred_fallthru
    _

</llo_original>
